<compile_context>
chip_gen: v6e
topology: v6e:2x2x1
jax: 0.10.0
libtpu: 0.0.40
codegen_flags: <defaults>
</compile_context>

<pallas_src>
import functools

import jax
import jax.numpy as jnp
from jax.experimental import pallas as pl
from jax.experimental.pallas import tpu as pltpu


def _round_up(x, m):
    return (x + m - 1) // m * m


def post_model_kernel(ids_ref, table_ref, out_ref, *, vt_pad, va_pad):
    # ids_ref:   (TN, NVQ+1) int32. Column 0: text id (or -1 on code/pad rows);
    #            column 1+i: code-table-i id (or -1 on text/pad rows).
    # table_ref: (vt_pad + NVQ*va_pad, H_pad)  bf16, concatenated + zero-padded.
    # out_ref:   (TN, H_pad) f32.
    ids = ids_ref[...]
    tn = ids.shape[0]
    num_vq = ids.shape[1] - 1

    iota_t = jax.lax.broadcasted_iota(jnp.int32, (tn, vt_pad), 1)
    iota_a = (iota_t if va_pad == vt_pad
              else jax.lax.broadcasted_iota(jnp.int32, (tn, va_pad), 1))

    # Per-table one-hot blocks (sentinel -1 rows are all zero), lane-concatenated
    # into a single multi-hot LHS -> one MXU matmul over K = vt_pad + NVQ*va_pad.
    blocks = [(ids[:, 0:1] == iota_t).astype(jnp.bfloat16)]
    for i in range(num_vq):  # static unroll, num_vq is small
        blocks.append((ids[:, i + 1:i + 2] == iota_a).astype(jnp.bfloat16))
    lhs = jnp.concatenate(blocks, axis=1)  # (TN, vt_pad + NVQ*va_pad)

    out_ref[...] = jnp.dot(lhs, table_ref[...],
                           preferred_element_type=jnp.float32)


def prepare_post_model_tables(emb_text_w, emb_code_w, table_dtype=jnp.bfloat16):
    """Pad / cast / concatenate the embedding tables once at weight-load time.

    emb_text_w: (Vt, H) f32, emb_code_w: (NVQ, Va, H) f32.
    Returns (table, meta): table is (vt_pad + NVQ*va_pad, h_pad) in table_dtype.
    """
    num_text, hidden = emb_text_w.shape
    num_vq, num_audio, _ = emb_code_w.shape
    vt_pad = _round_up(num_text, 128)   # lane-dense one-hot compares
    va_pad = _round_up(num_audio, 128)
    h_pad = _round_up(hidden, 128)      # lane-dense output stores

    text_p = jnp.pad(emb_text_w.astype(table_dtype),
                     ((0, vt_pad - num_text), (0, h_pad - hidden)))
    code_p = jnp.pad(emb_code_w.astype(table_dtype),
                     ((0, 0), (0, va_pad - num_audio), (0, h_pad - hidden)))
    table = jnp.concatenate(
        [text_p, code_p.reshape(num_vq * va_pad, h_pad)], axis=0)
    meta = dict(vt_pad=vt_pad, va_pad=va_pad, h_pad=h_pad,
                hidden=hidden, num_vq=num_vq)
    return table, meta


def post_model_forward(input_ids, text_mask, table, meta, *, tile_n=256):
    """input_ids: (B, S, NVQ) int, text_mask: (B, S) bool.
    table/meta: from prepare_post_model_tables. Returns (B, S, H) f32."""
    B, S, num_vq = input_ids.shape
    assert num_vq == meta["num_vq"]
    hidden, h_pad = meta["hidden"], meta["h_pad"]
    v_comb = table.shape[0]
    N = B * S

    # Fold the text/code mask into the ids: the -1 sentinel never matches the
    # kernel's iota, so the corresponding one-hot row is all zeros.
    ids_flat = input_ids.reshape(N, num_vq).astype(jnp.int32)
    mask_flat = text_mask.reshape(N, 1).astype(bool)
    ids_text = jnp.where(mask_flat, ids_flat[:, 0:1], -1)        # (N, 1)
    ids_code = jnp.where(mask_flat, -1, ids_flat)                # (N, NVQ)
    ids_eff = jnp.concatenate([ids_text, ids_code], axis=1)      # (N, NVQ+1)

    # Row tile: multiple of 8 (sublane), capped at padded N; real-sized inputs
    # give many grid steps so the "parallel" axis shards across v7x's two TCs.
    tile = min(tile_n, _round_up(N, 8))
    n_pad = _round_up(N, tile)
    if n_pad != N:
        ids_eff = jnp.pad(ids_eff, ((0, n_pad - N), (0, 0)), constant_values=-1)

    # Explicit VMEM budget only if the resident table outgrows the scoped
    # default (16 MiB v5e / 32 MiB v6e,v7x); demo scale keeps the default.
    table_bytes = int(table.size) * table.dtype.itemsize
    per_step_bytes = tile * (h_pad * 4 + (num_vq + 1) * 4) * 2 + tile * v_comb * 2
    need = table_bytes + per_step_bytes + (2 << 20)
    cp_kwargs = dict(dimension_semantics=("parallel",))
    if need > (24 << 20):
        cp_kwargs["vmem_limit_bytes"] = int(min(need + (8 << 20), 100 << 20))

    kernel = functools.partial(post_model_kernel,
                               vt_pad=meta["vt_pad"], va_pad=meta["va_pad"])

    out = pl.pallas_call(
        kernel,
        out_shape=jax.ShapeDtypeStruct((n_pad, h_pad), jnp.float32),
        grid=(n_pad // tile,),
        in_specs=[
            pl.BlockSpec((tile, num_vq + 1), lambda i: (i, 0)),
            # Grid-invariant table: single-buffered (no re-DMA ever happens),
            # halving its VMEM footprint.
            pl.BlockSpec((v_comb, h_pad), lambda i: (0, 0),
                         pipeline_mode=pl.Buffered(1)),
        ],
        out_specs=pl.BlockSpec((tile, h_pad), lambda i: (i, 0)),
        compiler_params=pltpu.CompilerParams(**cp_kwargs),
    )(ids_eff, table)

    return out[:N, :hidden].reshape(B, S, hidden)


def post_model_reference(input_ids, text_mask, emb_text_w, emb_code_w):
    """Pure-JAX reference of PostModel.forward (f32 weights)."""
    num_vq = input_ids.shape[-1]
    e_text = emb_text_w[input_ids[..., 0]]
    e_code = jnp.zeros_like(e_text)
    for i in range(num_vq):
        e_code = e_code + emb_code_w[i][input_ids[..., i]]
    return jnp.where(text_mask[..., None], e_text, e_code)


if __name__ == "__main__":
    # Small shapes consistent with the module:
    #   hidden_size=32, num_audio_tokens=40, num_text_tokens=48, num_vq=4,
    #   batch=2, seq=8.
    B, S = 2, 8
    H = 32
    NUM_VQ = 4
    NUM_AUDIO = 40
    NUM_TEXT = 48

    key = jax.random.PRNGKey(0)
    k_text, k_code, k_ids, k_mask = jax.random.split(key, 4)

    # Deterministic synthetic parameters (embedding tables only — the weight-
    # normed head_text/head_code linears are defined in __init__ but unused in
    # forward, so they are not materialized here).
    emb_text_w = jax.random.normal(k_text, (NUM_TEXT, H), jnp.float32) * 0.02
    emb_code_w = jax.random.normal(k_code, (NUM_VQ, NUM_AUDIO, H), jnp.float32) * 0.02

    input_ids = jax.random.randint(
        k_ids, (B, S, NUM_VQ), 0, min(NUM_AUDIO, NUM_TEXT), dtype=jnp.int32
    )
    text_mask = jax.random.bernoulli(k_mask, 0.5, (B, S))

    # Table padding / cast / concatenation is hoisted out of the per-call path.
    table, meta = prepare_post_model_tables(emb_text_w, emb_code_w)

    out = post_model_forward(input_ids, text_mask, table, meta)
    out = jax.block_until_ready(out)

    ref = post_model_reference(input_ids, text_mask, emb_text_w, emb_code_w)
    assert out.shape == (B, S, H)
    assert out.dtype == jnp.float32
    # Tables are stored in bf16 (the one-hot matmul itself is exact); the
    # tolerance only covers bf16 rounding of the weights.
    assert jnp.allclose(out, ref, atol=5e-3, rtol=0), "mismatch vs reference"

    print("KERNEL_OK")
</pallas_src>

<mosaic_0001>
module attributes {stable_mosaic.version = 11 : i64} {
  func.func @post_model_kernel(%arg0: i32, %arg1: memref<16x5xi32, #tpu.memory_space<vmem>>, %arg2: memref<640x128xbf16, #tpu.memory_space<vmem>>, %arg3: memref<16x128xf32, #tpu.memory_space<vmem>>) attributes {dimension_semantics = [#tpu.dimension_semantics<parallel>], iteration_bounds = array<i64: 1>, scalar_prefetch = 0 : i64, scratch_operands = 0 : i64, tpu.core_type = #tpu.core_type<tc>, window_params = [{transform_indices = @transform_0, window_bounds = array<i64: 16, 5>}, {pipeline_mode = #tpu.pipeline_mode<synchronous>, transform_indices = @transform_1, window_bounds = array<i64: 640, 128>}, {transform_indices = @transform_2, window_bounds = array<i64: 16, 128>}]} {
    %c0 = arith.constant 0 : index
    %c0_0 = arith.constant 0 : index
    %0 = vector.load %arg1[%c0, %c0_0] : memref<16x5xi32, #tpu.memory_space<vmem>>, vector<16x5xi32>
    %1 = tpu.iota {dimensions = array<i32: 1>} : vector<16x128xi32>
    %2 = vector.extract_strided_slice %0 {offsets = [0, 0], sizes = [16, 1], strides = [1, 1]} : vector<16x5xi32> to vector<16x1xi32>
    %3 = vector.broadcast %2 : vector<16x1xi32> to vector<16x128xi32>
    %4 = arith.cmpi eq, %3, %1 : vector<16x128xi32>
    %5 = arith.extui %4 : vector<16x128xi1> to vector<16x128xi32>
    %6 = arith.sitofp %5 : vector<16x128xi32> to vector<16x128xf32>
    %7 = arith.truncf %6 : vector<16x128xf32> to vector<16x128xbf16>
    %8 = vector.extract_strided_slice %0 {offsets = [0, 1], sizes = [16, 1], strides = [1, 1]} : vector<16x5xi32> to vector<16x1xi32>
    %9 = vector.broadcast %8 : vector<16x1xi32> to vector<16x128xi32>
    %10 = arith.cmpi eq, %9, %1 : vector<16x128xi32>
    %11 = arith.extui %10 : vector<16x128xi1> to vector<16x128xi32>
    %12 = arith.sitofp %11 : vector<16x128xi32> to vector<16x128xf32>
    %13 = arith.truncf %12 : vector<16x128xf32> to vector<16x128xbf16>
    %14 = vector.extract_strided_slice %0 {offsets = [0, 2], sizes = [16, 1], strides = [1, 1]} : vector<16x5xi32> to vector<16x1xi32>
    %15 = vector.broadcast %14 : vector<16x1xi32> to vector<16x128xi32>
    %16 = arith.cmpi eq, %15, %1 : vector<16x128xi32>
    %17 = arith.extui %16 : vector<16x128xi1> to vector<16x128xi32>
    %18 = arith.sitofp %17 : vector<16x128xi32> to vector<16x128xf32>
    %19 = arith.truncf %18 : vector<16x128xf32> to vector<16x128xbf16>
    %20 = vector.extract_strided_slice %0 {offsets = [0, 3], sizes = [16, 1], strides = [1, 1]} : vector<16x5xi32> to vector<16x1xi32>
    %21 = vector.broadcast %20 : vector<16x1xi32> to vector<16x128xi32>
    %22 = arith.cmpi eq, %21, %1 : vector<16x128xi32>
    %23 = arith.extui %22 : vector<16x128xi1> to vector<16x128xi32>
    %24 = arith.sitofp %23 : vector<16x128xi32> to vector<16x128xf32>
    %25 = arith.truncf %24 : vector<16x128xf32> to vector<16x128xbf16>
    %26 = vector.extract_strided_slice %0 {offsets = [0, 4], sizes = [16, 1], strides = [1, 1]} : vector<16x5xi32> to vector<16x1xi32>
    %27 = vector.broadcast %26 : vector<16x1xi32> to vector<16x128xi32>
    %28 = arith.cmpi eq, %27, %1 : vector<16x128xi32>
    %29 = arith.extui %28 : vector<16x128xi1> to vector<16x128xi32>
    %30 = arith.sitofp %29 : vector<16x128xi32> to vector<16x128xf32>
    %31 = arith.truncf %30 : vector<16x128xf32> to vector<16x128xbf16>
    %32 = tpu.concatenate %7, %13, %19, %25, %31 in 1 : vector<16x128xbf16>, vector<16x128xbf16>, vector<16x128xbf16>, vector<16x128xbf16>, vector<16x128xbf16> -> vector<16x640xbf16>
    %c0_1 = arith.constant 0 : index
    %c0_2 = arith.constant 0 : index
    %33 = vector.load %arg2[%c0_1, %c0_2] : memref<640x128xbf16, #tpu.memory_space<vmem>>, vector<640x128xbf16>
    %cst = arith.constant dense<0.000000e+00> : vector<16x128xf32>
    %34 = tpu.matmul %32, %33, %cst {dimension_numbers = #tpu.dot_dimension_numbers<[1], [0], [0], [1], [0, 0, 1, 1], [], []>} : vector<16x640xbf16>, vector<640x128xbf16>, vector<16x128xf32> -> vector<16x128xf32>
    %c0_3 = arith.constant 0 : index
    %c0_4 = arith.constant 0 : index
    %35 = vector.load %arg3[%c0_3, %c0_4] : memref<16x128xf32, #tpu.memory_space<vmem>>, vector<16x128xf32>
    tpu.vector_store %arg3[%c0_3, %c0_4], %34 {strides = array<i32>} : memref<16x128xf32, #tpu.memory_space<vmem>>, vector<16x128xf32>,
    return
  }
  func.func @transform_0(%arg0: i32) -> (i32, i32) {
    %c0_i32 = arith.constant 0 : i32
    %c0_i32_0 = arith.constant 0 : i32
    return %arg0, %c0_i32 : i32, i32
  }
  func.func @transform_1(%arg0: i32) -> (i32, i32) {
    %c0_i32 = arith.constant 0 : i32
    %c0_i32_0 = arith.constant 0 : i32
    %c0_i32_1 = arith.constant 0 : i32
    return %c0_i32, %c0_i32_0 : i32, i32
  }
  func.func @transform_2(%arg0: i32) -> (i32, i32) {
    %c0_i32 = arith.constant 0 : i32
    %c0_i32_0 = arith.constant 0 : i32
    return %arg0, %c0_i32 : i32, i32
  }
}

</mosaic_0001>

<llo_original>
// kernel: tpu_custom_call.1
$region0: #{tpu_custom_call.1}
  #allocation0 [shape = 'u32[]', space=smem, size = 0x4, offset = 0x4, fixed_abs, tag = 'smem constant byte address 0x4 - core index']
  #allocation1 [shape = 'u32[144,128]{1,0:T(1,128)}', space=vmem, size = 0x12000, scoped, tag = 'internal scratch']
  %s0 = inlined_call_operand.vmem [shape: s32[16,5], index: 0, kind: input, shape index: {}]
  %s1 = inlined_call_operand.hbm [shape: bf16[640,128], index: 1, kind: input, shape index: {}]
  %s2 = inlined_call_operand.hbm [shape: f32[16,128], index: 2, kind: output, shape index: {}]
  %s3 = sld [smem:[#allocation0]]
  $region22: #{tpu_custom_call.1} parent=0
    _
  %s5 = ssub.s32 1, %s3
  %s6 = scalar_select 0, %s5, %s3
  $region1: #{tpu_custom_call.1} parent=0
    #allocation2 [shape = 'u8[163840]{0}', space=vmem, size = 0x28000, scoped, tag = 'input window, operand 1, single buffered']
    #allocation3 [shape = 's32[1]{0}', space=sflag, size = 0x4, scoped, tag = 'scoped memory for tpu_custom_call.1']
    #allocation4 [shape = 's32[1]{0}', space=sflag, size = 0x4, scoped, tag = 'scoped memory for tpu_custom_call.1']
    #allocation5 [shape = 'u8[8192]{0}', space=vmem, size = 0x2000, scoped, tag = 'output window, operand 0, single buffered']
    %7 = vsyncpa [#allocation3], 0
    %8 = vsyncpa [#allocation4], 0
    // Predicated region
    $region2: #{tpu_custom_call.1} parent=1 // pred_check
      _
    $region3: #{tpu_custom_call.1} parent=1 // pred_check_branch
      %10 = sbr.rel (0) target = $region5
    $region4: #{tpu_custom_call.1} parent=1 // pred_region
      _
    $region5: #{tpu_custom_call.1} parent=1 // pred_fallthru
      _
    // Predicated region
    $region6: #{tpu_custom_call.1} parent=1 // pred_check
      _
    $region7: #{tpu_custom_call.1} parent=1 // pred_check_branch
      %12 = sbr.rel (0) target = $region9
    $region8: #{tpu_custom_call.1} parent=1 // pred_region
      %s14 = ssub.s32 5120, 5120
      %15 = vsyncadd [#allocation3], %s14
      %s16 = sshll.u32 [#allocation2], 4
      %s17 = int_to_ptr.vmem [resolvable:$true] %s16
      %22 = dma.hbm_to_vmem [thread:$0]  %s1, 5120, %s17, [#allocation3], 64, 64, 4
    $region9: #{tpu_custom_call.1} parent=1 // pred_fallthru
      _
    // Predicated region
    $region10: #{tpu_custom_call.1} parent=1 // pred_check
      _
    $region11: #{tpu_custom_call.1} parent=1 // pred_check_branch
      %24 = sbr.rel (0) target = $region13
    $region12: #{tpu_custom_call.1} parent=1 // pred_region
      %25 = dma.done [#allocation3], 5120
    $region13: #{tpu_custom_call.1} parent=1 // pred_fallthru
      _
    %v27 = vld [vmem:[%s0] sm:$0xff]
    %v28 = vld [vmem:[%s0 + $0x8] sm:$0xff]
    %v29 = vlaneseq
    %v30 = vand.u32 %v29, 127
    %31 = vset.pattern.permute.xlu0 0
    %32 = vperm.xlu0 %31, %v27
    %v33 = vpop.permute.xlu0 %32
    %34 = vset.pattern.permute.xlu0 0
    %35 = vperm.xlu0 %34, %v28
    %v36 = vpop.permute.xlu0 %35
    %vm37 = vcmp.eq.s32.totalorder %v33, %v30
    %vm38 = vcmp.eq.s32.totalorder %v36, %v30
    %v39 = vsel %vm37, 1, 0
    %v40 = vsel %vm38, 1, 0
    %v41 = vcvt.s32.f32 %v39
    %v42 = vcvt.s32.f32 %v40
    %v43 = vpack.c.bf16 %v42, %v41
    %44 = vset.pattern.permute.xlu0 1
    %45 = vperm.xlu0 %44, %v27
    %v46 = vpop.permute.xlu0 %45
    %47 = vset.pattern.permute.xlu0 1
    %48 = vperm.xlu0 %47, %v28
    %v49 = vpop.permute.xlu0 %48
    %vm50 = vcmp.eq.s32.totalorder %v46, %v30
    %vm51 = vcmp.eq.s32.totalorder %v49, %v30
    %v52 = vsel %vm50, 1, 0
    %v53 = vsel %vm51, 1, 0
    %v54 = vcvt.s32.f32 %v52
    %v55 = vcvt.s32.f32 %v53
    %v56 = vpack.c.bf16 %v55, %v54
    %57 = vset.pattern.permute.xlu0 2
    %58 = vperm.xlu0 %57, %v27
    %v59 = vpop.permute.xlu0 %58
    %60 = vset.pattern.permute.xlu0 2
    %61 = vperm.xlu0 %60, %v28
    %v62 = vpop.permute.xlu0 %61
    %vm63 = vcmp.eq.s32.totalorder %v59, %v30
    %vm64 = vcmp.eq.s32.totalorder %v62, %v30
    %v65 = vsel %vm63, 1, 0
    %v66 = vsel %vm64, 1, 0
    %v67 = vcvt.s32.f32 %v65
    %v68 = vcvt.s32.f32 %v66
    %v69 = vpack.c.bf16 %v68, %v67
    %70 = vset.pattern.permute.xlu0 3
    %71 = vperm.xlu0 %70, %v27
    %v72 = vpop.permute.xlu0 %71
    %73 = vset.pattern.permute.xlu0 3
    %74 = vperm.xlu0 %73, %v28
    %v75 = vpop.permute.xlu0 %74
    %vm76 = vcmp.eq.s32.totalorder %v72, %v30
    %vm77 = vcmp.eq.s32.totalorder %v75, %v30
    %v78 = vsel %vm76, 1, 0
    %v79 = vsel %vm77, 1, 0
    %v80 = vcvt.s32.f32 %v78
    %v81 = vcvt.s32.f32 %v79
    %v82 = vpack.c.bf16 %v81, %v80
    %83 = vset.pattern.permute.xlu0 4
    %84 = vperm.xlu0 %83, %v27
    %v85 = vpop.permute.xlu0 %84
    %86 = vset.pattern.permute.xlu0 4
    %87 = vperm.xlu0 %86, %v28
    %v88 = vpop.permute.xlu0 %87
    %vm89 = vcmp.eq.s32.totalorder %v85, %v30
    %vm90 = vcmp.eq.s32.totalorder %v88, %v30
    %v91 = vsel %vm89, 1, 0
    %v92 = vsel %vm90, 1, 0
    %v93 = vcvt.s32.f32 %v91
    %v94 = vcvt.s32.f32 %v92
    %v95 = vpack.c.bf16 %v94, %v93
    %v96 = vld [vmem:[#allocation2] sm:$0xf]
    %v97 = vld [vmem:[#allocation2 + $0x4] sm:$0xf]
    %v98 = vld [vmem:[#allocation2 + $0x8] sm:$0xf]
    %v99 = vld [vmem:[#allocation2 + $0xc] sm:$0xf]
    %v100 = vld [vmem:[#allocation2 + $0x10] sm:$0xf]
    %v101 = vld [vmem:[#allocation2 + $0x14] sm:$0xf]
    %v102 = vld [vmem:[#allocation2 + $0x18] sm:$0xf]
    %v103 = vld [vmem:[#allocation2 + $0x1c] sm:$0xf]
    %v104 = vld [vmem:[#allocation2 + $0x20] sm:$0xf]
    %v105 = vld [vmem:[#allocation2 + $0x24] sm:$0xf]
    %v106 = vld [vmem:[#allocation2 + $0x28] sm:$0xf]
    %v107 = vld [vmem:[#allocation2 + $0x2c] sm:$0xf]
    %v108 = vld [vmem:[#allocation2 + $0x30] sm:$0xf]
    %v109 = vld [vmem:[#allocation2 + $0x34] sm:$0xf]
    %v110 = vld [vmem:[#allocation2 + $0x38] sm:$0xf]
    %v111 = vld [vmem:[#allocation2 + $0x3c] sm:$0xf]
    %v112 = vld [vmem:[#allocation2 + $0x40] sm:$0xf]
    %v113 = vld [vmem:[#allocation2 + $0x44] sm:$0xf]
    %v114 = vld [vmem:[#allocation2 + $0x48] sm:$0xf]
    %v115 = vld [vmem:[#allocation2 + $0x4c] sm:$0xf]
    %v116 = vld [vmem:[#allocation2 + $0x50] sm:$0xf]
    %v117 = vld [vmem:[#allocation2 + $0x54] sm:$0xf]
    %v118 = vld [vmem:[#allocation2 + $0x58] sm:$0xf]
    %v119 = vld [vmem:[#allocation2 + $0x5c] sm:$0xf]
    %v120 = vld [vmem:[#allocation2 + $0x60] sm:$0xf]
    %v121 = vld [vmem:[#allocation2 + $0x64] sm:$0xf]
    %v122 = vld [vmem:[#allocation2 + $0x68] sm:$0xf]
    %v123 = vld [vmem:[#allocation2 + $0x6c] sm:$0xf]
    %v124 = vld [vmem:[#allocation2 + $0x70] sm:$0xf]
    %v125 = vld [vmem:[#allocation2 + $0x74] sm:$0xf]
    %v126 = vld [vmem:[#allocation2 + $0x78] sm:$0xf]
    %v127 = vld [vmem:[#allocation2 + $0x7c] sm:$0xf]
    %v128 = vld [vmem:[#allocation2 + $0x80] sm:$0xf]
    %v129 = vld [vmem:[#allocation2 + $0x84] sm:$0xf]
    %v130 = vld [vmem:[#allocation2 + $0x88] sm:$0xf]
    %v131 = vld [vmem:[#allocation2 + $0x8c] sm:$0xf]
    %v132 = vld [vmem:[#allocation2 + $0x90] sm:$0xf]
    %v133 = vld [vmem:[#allocation2 + $0x94] sm:$0xf]
    %v134 = vld [vmem:[#allocation2 + $0x98] sm:$0xf]
    %v135 = vld [vmem:[#allocation2 + $0x9c] sm:$0xf]
    %v136 = vld [vmem:[#allocation2 + $0xa0] sm:$0xf]
    %v137 = vld [vmem:[#allocation2 + $0xa4] sm:$0xf]
    %v138 = vld [vmem:[#allocation2 + $0xa8] sm:$0xf]
    %v139 = vld [vmem:[#allocation2 + $0xac] sm:$0xf]
    %v140 = vld [vmem:[#allocation2 + $0xb0] sm:$0xf]
    %v141 = vld [vmem:[#allocation2 + $0xb4] sm:$0xf]
    %v142 = vld [vmem:[#allocation2 + $0xb8] sm:$0xf]
    %v143 = vld [vmem:[#allocation2 + $0xbc] sm:$0xf]
    %v144 = vld [vmem:[#allocation2 + $0xc0] sm:$0xf]
    %v145 = vld [vmem:[#allocation2 + $0xc4] sm:$0xf]
    %v146 = vld [vmem:[#allocation2 + $0xc8] sm:$0xf]
    %v147 = vld [vmem:[#allocation2 + $0xcc] sm:$0xf]
    %v148 = vld [vmem:[#allocation2 + $0xd0] sm:$0xf]
    %v149 = vld [vmem:[#allocation2 + $0xd4] sm:$0xf]
    %v150 = vld [vmem:[#allocation2 + $0xd8] sm:$0xf]
    %v151 = vld [vmem:[#allocation2 + $0xdc] sm:$0xf]
    %v152 = vld [vmem:[#allocation2 + $0xe0] sm:$0xf]
    %v153 = vld [vmem:[#allocation2 + $0xe4] sm:$0xf]
    %v154 = vld [vmem:[#allocation2 + $0xe8] sm:$0xf]
    %v155 = vld [vmem:[#allocation2 + $0xec] sm:$0xf]
    %v156 = vld [vmem:[#allocation2 + $0xf0] sm:$0xf]
    %v157 = vld [vmem:[#allocation2 + $0xf4] sm:$0xf]
    %v158 = vld [vmem:[#allocation2 + $0xf8] sm:$0xf]
    %v159 = vld [vmem:[#allocation2 + $0xfc] sm:$0xf]
    %v160 = vld [vmem:[#allocation2 + $0x100] sm:$0xf]
    %v161 = vld [vmem:[#allocation2 + $0x104] sm:$0xf]
    %v162 = vld [vmem:[#allocation2 + $0x108] sm:$0xf]
    %v163 = vld [vmem:[#allocation2 + $0x10c] sm:$0xf]
    %v164 = vld [vmem:[#allocation2 + $0x110] sm:$0xf]
    %v165 = vld [vmem:[#allocation2 + $0x114] sm:$0xf]
    %v166 = vld [vmem:[#allocation2 + $0x118] sm:$0xf]
    %v167 = vld [vmem:[#allocation2 + $0x11c] sm:$0xf]
    %v168 = vld [vmem:[#allocation2 + $0x120] sm:$0xf]
    %v169 = vld [vmem:[#allocation2 + $0x124] sm:$0xf]
    %v170 = vld [vmem:[#allocation2 + $0x128] sm:$0xf]
    %v171 = vld [vmem:[#allocation2 + $0x12c] sm:$0xf]
    %v172 = vld [vmem:[#allocation2 + $0x130] sm:$0xf]
    %v173 = vld [vmem:[#allocation2 + $0x134] sm:$0xf]
    %v174 = vld [vmem:[#allocation2 + $0x138] sm:$0xf]
    %v175 = vld [vmem:[#allocation2 + $0x13c] sm:$0xf]
    %v256 = vunpack.c.l.b16 %v96
    %v257 = vunpack.c.l.b16 %v97
    %v258 = vunpack.c.l.b16 %v98
    %v259 = vunpack.c.l.b16 %v99
    %v260 = vunpack.c.l.b16 %v100
    %v261 = vunpack.c.l.b16 %v101
    %v262 = vunpack.c.l.b16 %v102
    %v263 = vunpack.c.l.b16 %v103
    %v264 = vunpack.c.l.b16 %v104
    %v265 = vunpack.c.l.b16 %v105
    %v266 = vunpack.c.l.b16 %v106
    %v267 = vunpack.c.l.b16 %v107
    %v268 = vunpack.c.l.b16 %v108
    %v269 = vunpack.c.l.b16 %v109
    %v270 = vunpack.c.l.b16 %v110
    %v271 = vunpack.c.l.b16 %v111
    %v272 = vunpack.c.l.b16 %v112
    %v273 = vunpack.c.l.b16 %v113
    %v274 = vunpack.c.l.b16 %v114
    %v275 = vunpack.c.l.b16 %v115
    %v276 = vunpack.c.l.b16 %v116
    %v277 = vunpack.c.l.b16 %v117
    %v278 = vunpack.c.l.b16 %v118
    %v279 = vunpack.c.l.b16 %v119
    %v280 = vunpack.c.l.b16 %v120
    %v281 = vunpack.c.l.b16 %v121
    %v282 = vunpack.c.l.b16 %v122
    %v283 = vunpack.c.l.b16 %v123
    %v284 = vunpack.c.l.b16 %v124
    %v285 = vunpack.c.l.b16 %v125
    %v286 = vunpack.c.l.b16 %v126
    %v287 = vunpack.c.l.b16 %v127
    %v288 = vunpack.c.l.b16 %v128
    %v289 = vunpack.c.l.b16 %v129
    %v290 = vunpack.c.l.b16 %v130
    %v291 = vunpack.c.l.b16 %v131
    %v292 = vunpack.c.l.b16 %v132
    %v293 = vunpack.c.l.b16 %v133
    %v294 = vunpack.c.l.b16 %v134
    %v295 = vunpack.c.l.b16 %v135
    %v296 = vunpack.c.l.b16 %v136
    %v297 = vunpack.c.l.b16 %v137
    %v298 = vunpack.c.l.b16 %v138
    %v299 = vunpack.c.l.b16 %v139
    %v300 = vunpack.c.l.b16 %v140
    %v301 = vunpack.c.l.b16 %v141
    %v302 = vunpack.c.l.b16 %v142
    %v303 = vunpack.c.l.b16 %v143
    %v304 = vunpack.c.l.b16 %v144
    %v305 = vunpack.c.l.b16 %v145
    %v306 = vunpack.c.l.b16 %v146
    %v307 = vunpack.c.l.b16 %v147
    %v308 = vunpack.c.l.b16 %v148
    %v309 = vunpack.c.l.b16 %v149
    %v310 = vunpack.c.l.b16 %v150
    %v311 = vunpack.c.l.b16 %v151
    %v312 = vunpack.c.l.b16 %v152
    %v313 = vunpack.c.l.b16 %v153
    %v314 = vunpack.c.l.b16 %v154
    %v315 = vunpack.c.l.b16 %v155
    %v316 = vunpack.c.l.b16 %v156
    %v317 = vunpack.c.l.b16 %v157
    %v318 = vunpack.c.l.b16 %v158
    %v319 = vunpack.c.l.b16 %v159
    %v320 = vunpack.c.l.b16 %v160
    %v321 = vunpack.c.l.b16 %v161
    %v322 = vunpack.c.l.b16 %v162
    %v323 = vunpack.c.l.b16 %v163
    %v324 = vunpack.c.l.b16 %v164
    %v325 = vunpack.c.l.b16 %v165
    %v326 = vunpack.c.l.b16 %v166
    %v327 = vunpack.c.l.b16 %v167
    %v328 = vunpack.c.l.b16 %v168
    %v329 = vunpack.c.l.b16 %v169
    %v330 = vunpack.c.l.b16 %v170
    %v331 = vunpack.c.l.b16 %v171
    %v332 = vunpack.c.l.b16 %v172
    %v333 = vunpack.c.l.b16 %v173
    %v334 = vunpack.c.l.b16 %v174
    %v335 = vunpack.c.l.b16 %v175
    %v336 = vpack.c.b16 %v257, %v256
    %v337 = vpack.c.b16 %v259, %v258
    %v338 = vpack.c.b16 %v261, %v260
    %v339 = vpack.c.b16 %v263, %v262
    %v340 = vpack.c.b16 %v265, %v264
    %v341 = vpack.c.b16 %v267, %v266
    %v342 = vpack.c.b16 %v269, %v268
    %v343 = vpack.c.b16 %v271, %v270
    %v344 = vpack.c.b16 %v273, %v272
    %v345 = vpack.c.b16 %v275, %v274
    %v346 = vpack.c.b16 %v277, %v276
    %v347 = vpack.c.b16 %v279, %v278
    %v348 = vpack.c.b16 %v281, %v280
    %v349 = vpack.c.b16 %v283, %v282
    %v350 = vpack.c.b16 %v285, %v284
    %v351 = vpack.c.b16 %v287, %v286
    %v352 = vpack.c.b16 %v289, %v288
    %v353 = vpack.c.b16 %v291, %v290
    %v354 = vpack.c.b16 %v293, %v292
    %v355 = vpack.c.b16 %v295, %v294
    %v356 = vpack.c.b16 %v297, %v296
    %v357 = vpack.c.b16 %v299, %v298
    %v358 = vpack.c.b16 %v301, %v300
    %v359 = vpack.c.b16 %v303, %v302
    %v360 = vpack.c.b16 %v305, %v304
    %v361 = vpack.c.b16 %v307, %v306
    %v362 = vpack.c.b16 %v309, %v308
    %v363 = vpack.c.b16 %v311, %v310
    %v364 = vpack.c.b16 %v313, %v312
    %v365 = vpack.c.b16 %v315, %v314
    %v366 = vpack.c.b16 %v317, %v316
    %v367 = vpack.c.b16 %v319, %v318
    %v368 = vpack.c.b16 %v321, %v320
    %v369 = vpack.c.b16 %v323, %v322
    %v370 = vpack.c.b16 %v325, %v324
    %v371 = vpack.c.b16 %v327, %v326
    %v372 = vpack.c.b16 %v329, %v328
    %v373 = vpack.c.b16 %v331, %v330
    %v374 = vpack.c.b16 %v333, %v332
    %v375 = vpack.c.b16 %v335, %v334
    %416 = vmatprep.subr.bf16.mxu0 0
    %417 = vmatpush1.bf16.msra.mxu0 %v343
    %418 = vmatprep.subr.bf16.mxu0 0
    %419 = vmatpush1.bf16.msra.mxu0 %v342
    %420 = vmatprep.subr.bf16.mxu0 0
    %421 = vmatpush1.bf16.msra.mxu0 %v341
    %422 = vmatprep.subr.bf16.mxu0 0
    %423 = vmatpush1.bf16.msra.mxu0 %v340
    %424 = vmatprep.subr.bf16.mxu0 0
    %425 = vmatpush1.bf16.msra.mxu0 %v339
    %426 = vmatprep.subr.bf16.mxu0 0
    %427 = vmatpush1.bf16.msra.mxu0 %v338
    %428 = vmatprep.subr.bf16.mxu0 0
    %429 = vmatpush1.bf16.msra.mxu0 %v337
    %430 = vmatprep.subr.bf16.mxu0 0
    %431 = vmatpush1.bf16.msra.mxu0 %v336
    %432 = vmatprep.subr.bf16.mxu0 0
    %433 = vmatpush2.bf16.msra.mxu0 %v351
    %434 = vmatprep.subr.bf16.mxu0 0
    %435 = vmatpush2.bf16.msra.mxu0 %v350
    %436 = vmatprep.subr.bf16.mxu0 0
    %437 = vmatpush2.bf16.msra.mxu0 %v349
    %438 = vmatprep.subr.bf16.mxu0 0
    %439 = vmatpush2.bf16.msra.mxu0 %v348
    %440 = vmatprep.subr.bf16.mxu0 0
    %441 = vmatpush2.bf16.msra.mxu0 %v347
    %442 = vmatprep.subr.bf16.mxu0 0
    %443 = vmatpush2.bf16.msra.mxu0 %v346
    %444 = vmatprep.subr.bf16.mxu0 0
    %445 = vmatpush2.bf16.msra.mxu0 %v345
    %446 = vmatprep.subr.bf16.mxu0 0
    %447 = vmatpush2.bf16.msra.mxu0 %v344
    %448 = vmatprep.mubr.bf16.mxu0 %v56
    %449 = vmatmul.mubr.bf16.gmra.mxu0 %v43
    %v450 = vpop.f32.mrf.mxu0
    %v451 = vadd.f32 0.0, %v450
    %v452 = vpop.f32.mrf.mxu0
    %v453 = vpop.f32.mrf.mxu0
    %v454 = vadd.f32 0.0, %v453
    %v455 = vpop.f32.mrf.mxu0
    %456 = vdwg.mxu0
    %457 = vmatprep.subr.bf16.mxu0 0
    %458 = vmatpush1.bf16.msra.mxu0 %v359
    %459 = vmatprep.subr.bf16.mxu0 0
    %460 = vmatpush1.bf16.msra.mxu0 %v358
    %461 = vmatprep.subr.bf16.mxu0 0
    %462 = vmatpush1.bf16.msra.mxu0 %v357
    %463 = vmatprep.subr.bf16.mxu0 0
    %464 = vmatpush1.bf16.msra.mxu0 %v356
    %465 = vmatprep.subr.bf16.mxu0 0
    %466 = vmatpush1.bf16.msra.mxu0 %v355
    %467 = vmatprep.subr.bf16.mxu0 0
    %468 = vmatpush1.bf16.msra.mxu0 %v354
    %469 = vmatprep.subr.bf16.mxu0 0
    %470 = vmatpush1.bf16.msra.mxu0 %v353
    %471 = vmatprep.subr.bf16.mxu0 0
    %472 = vmatpush1.bf16.msra.mxu0 %v352
    %473 = vmatprep.subr.bf16.mxu0 0
    %474 = vmatpush2.bf16.msra.mxu0 %v367
    %475 = vmatprep.subr.bf16.mxu0 0
    %476 = vmatpush2.bf16.msra.mxu0 %v366
    %477 = vmatprep.subr.bf16.mxu0 0
    %478 = vmatpush2.bf16.msra.mxu0 %v365
    %479 = vmatprep.subr.bf16.mxu0 0
    %480 = vmatpush2.bf16.msra.mxu0 %v364
    %481 = vmatprep.subr.bf16.mxu0 0
    %482 = vmatpush2.bf16.msra.mxu0 %v363
    %483 = vmatprep.subr.bf16.mxu0 0
    %484 = vmatpush2.bf16.msra.mxu0 %v362
    %485 = vmatprep.subr.bf16.mxu0 0
    %486 = vmatpush2.bf16.msra.mxu0 %v361
    %487 = vmatprep.subr.bf16.mxu0 0
    %488 = vmatpush2.bf16.msra.mxu0 %v360
    %489 = vmatprep.mubr.bf16.mxu0 %v82
    %490 = vmatmul.mubr.bf16.gmra.mxu0 %v69
    %v491 = vpop.f32.mrf.mxu0
    %v492 = vadd.f32 %v451, %v491
    %v493 = vpop.f32.mrf.mxu0
    %v494 = vpop.f32.mrf.mxu0
    %v495 = vadd.f32 %v454, %v494
    %v496 = vpop.f32.mrf.mxu0
    %497 = vdwg.mxu0
    %498 = vmatprep.subr.bf16.mxu0 0
    %499 = vmatpush1.bf16.msra.mxu0 %v375
    %500 = vmatprep.subr.bf16.mxu0 0
    %501 = vmatpush1.bf16.msra.mxu0 %v374
    %502 = vmatprep.subr.bf16.mxu0 0
    %503 = vmatpush1.bf16.msra.mxu0 %v373
    %504 = vmatprep.subr.bf16.mxu0 0
    %505 = vmatpush1.bf16.msra.mxu0 %v372
    %506 = vmatprep.subr.bf16.mxu0 0
    %507 = vmatpush1.bf16.msra.mxu0 %v371
    %508 = vmatprep.subr.bf16.mxu0 0
    %509 = vmatpush1.bf16.msra.mxu0 %v370
    %510 = vmatprep.subr.bf16.mxu0 0
    %511 = vmatpush1.bf16.msra.mxu0 %v369
    %512 = vmatprep.subr.bf16.mxu0 0
    %513 = vmatpush1.bf16.msra.mxu0 %v368
    %514 = vmatprep.subr.bf16.mxu0 0
    %515 = vmatpush2.bf16.msra.mxu0 0
    %516 = vmatprep.subr.bf16.mxu0 0
    %517 = vmatpush2.bf16.msra.mxu0 0
    %518 = vmatprep.subr.bf16.mxu0 0
    %519 = vmatpush2.bf16.msra.mxu0 0
    %520 = vmatprep.subr.bf16.mxu0 0
    %521 = vmatpush2.bf16.msra.mxu0 0
    %522 = vmatprep.subr.bf16.mxu0 0
    %523 = vmatpush2.bf16.msra.mxu0 0
    %524 = vmatprep.subr.bf16.mxu0 0
    %525 = vmatpush2.bf16.msra.mxu0 0
    %526 = vmatprep.subr.bf16.mxu0 0
    %527 = vmatpush2.bf16.msra.mxu0 0
    %528 = vmatprep.subr.bf16.mxu0 0
    %529 = vmatpush2.bf16.msra.mxu0 0
    %530 = vmatprep.mubr.bf16.mxu0 0
    %531 = vmatmul.mubr.bf16.gmra.mxu0 %v95
    %v532 = vpop.f32.mrf.mxu0
    %v533 = vadd.f32 %v492, %v532
    %v534 = vpop.f32.mrf.mxu0
    %v535 = vpop.f32.mrf.mxu0
    %v536 = vadd.f32 %v495, %v535
    %v537 = vpop.f32.mrf.mxu0
    %538 = vdwg.mxu0
    %539 = vst [vmem:[#allocation5] sm:$0xff] %v533
    %540 = vst [vmem:[#allocation5 + $0x8] sm:$0xff] %v536
    // Predicated region
    $region14: #{tpu_custom_call.1} parent=1 // pred_check
      _
    $region15: #{tpu_custom_call.1} parent=1 // pred_check_branch
      %542 = sbr.rel (0) target = $region17
    $region16: #{tpu_custom_call.1} parent=1 // pred_region
      %s544 = ssub.s32 256, 256
      %545 = vsyncadd [#allocation4], %s544
      %s546 = sshll.u32 [#allocation5], 4
      %s547 = int_to_ptr.vmem [resolvable:$true] %s546
      %552 = dma.vmem_to_hbm [thread:$0]  %s547, 256, %s2, [#allocation4], 128, 128, 8
    $region17: #{tpu_custom_call.1} parent=1 // pred_fallthru
      _
    // Predicated region
    $region18: #{tpu_custom_call.1} parent=1 // pred_check
      _
    $region19: #{tpu_custom_call.1} parent=1 // pred_check_branch
      %554 = sbr.rel (0) target = $region21
    $region20: #{tpu_custom_call.1} parent=1 // pred_region
      %555 = dma.done [#allocation4], 256
    $region21: #{tpu_custom_call.1} parent=1 // pred_fallthru
      _
    %556 = vsyncpa [#allocation3], 1
    %557 = vsyncpa [#allocation4], 1

</llo_original>
